<compile_context>
chip_gen: v7x
topology: tpu7x:2x2x1
jax: 0.10.0
libtpu: 0.0.40
codegen_flags: <defaults>
</compile_context>

<pallas_src>
import functools
import math

import jax
import jax.numpy as jnp
from jax import lax
from jax.experimental import pallas as pl
from jax.experimental.pallas import tpu as pltpu


def _self_attention_kernel(x_ref, wq_ref, bq_ref, wk_ref, bk_ref,
                           wv_ref, bv_ref, wo_ref, bo_ref, o_ref,
                           *, masked, compute_dtype):
    bb, T, D_in = x_ref.shape
    # Merge leading dims (layout no-op) so all projections are one tall matmul.
    x = x_ref[...].reshape(bb * T, D_in)

    # Fused projections, f32 accumulation on the MXU; bias adds stay f32.
    # (1/sqrt(key_dim) is already folded into wq/bq by the wrapper.)
    q = jnp.dot(x, wq_ref[...], preferred_element_type=jnp.float32) + bq_ref[...]
    k = jnp.dot(x, wk_ref[...], preferred_element_type=jnp.float32) + bk_ref[...]
    v = jnp.dot(x, wv_ref[...], preferred_element_type=jnp.float32) + bv_ref[...]

    qb = q.reshape(bb, T, -1).astype(compute_dtype)
    kb = k.reshape(bb, T, -1).astype(compute_dtype)
    vb = v.reshape(bb, T, -1).astype(compute_dtype)

    # scores: (bb, T, T); contract on the head dim of both operands -> no .T
    scores = jnp.einsum("bqd,bkd->bqk", qb, kb,
                        preferred_element_type=jnp.float32)

    if masked:
        row = lax.broadcasted_iota(jnp.int32, (bb, T, T), 1)
        col = lax.broadcasted_iota(jnp.int32, (bb, T, T), 2)
        scores = jnp.where(col <= row, scores, -jnp.inf)

    # softmax over the key axis (kept in f32).
    m = jnp.max(scores, axis=-1, keepdims=True)
    e = jnp.exp(scores - m)
    s = jnp.sum(e, axis=-1, keepdims=True)
    wts = e * pl.reciprocal(s, approx=False)

    y = jnp.einsum("bqk,bkv->bqv", wts.astype(compute_dtype), vb,
                   preferred_element_type=jnp.float32)

    V = y.shape[-1]
    y = y.reshape(bb * T, V)
    out = jnp.dot(y.astype(compute_dtype), wo_ref[...],
                  preferred_element_type=jnp.float32) + bo_ref[...]

    D_out = out.shape[-1]
    o_ref[...] = out.reshape(bb, T, D_out).astype(o_ref.dtype)


def self_attention(x, params, *, key_dim, masked=True, batch_block=None,
                   compute_dtype=jnp.float32):
    """x: (B, T, D_in) float32.  params: dict of (in, out) weights, (1, out) biases."""
    B, T, D_in = x.shape
    bb = B if batch_block is None else batch_block
    assert B % bb == 0, "batch_block must divide the batch size"

    # Fold the 1/sqrt(key_dim) score scale into the query projection.
    scale = 1.0 / math.sqrt(key_dim)
    wq = (params["wq"] * scale).astype(compute_dtype)
    bq = params["bq"] * scale                       # bias add stays f32
    wk = params["wk"].astype(compute_dtype)
    bk = params["bk"]
    wv = params["wv"].astype(compute_dtype)
    bv = params["bv"]
    wo = params["wo"].astype(compute_dtype)
    bo = params["bo"]
    D_out = wo.shape[1]

    x_c = x.astype(compute_dtype)

    kernel = functools.partial(_self_attention_kernel, masked=masked,
                               compute_dtype=compute_dtype)

    # Grid-invariant operands (constant index_map). At the default grid size of
    # 1 there is nothing to pipeline; with more steps these could additionally
    # take pipeline_mode=pl.Buffered(1) to drop the redundant second buffer.
    const = lambda i: (0, 0)
    weight_specs = [
        pl.BlockSpec(wq.shape, const), pl.BlockSpec(bq.shape, const),
        pl.BlockSpec(wk.shape, const), pl.BlockSpec(bk.shape, const),
        pl.BlockSpec(wv.shape, const), pl.BlockSpec(bv.shape, const),
        pl.BlockSpec(wo.shape, const), pl.BlockSpec(bo.shape, const),
    ]

    return pl.pallas_call(
        kernel,
        out_shape=jax.ShapeDtypeStruct((B, T, D_out), x.dtype),
        grid_spec=pltpu.PrefetchScalarGridSpec(
            num_scalar_prefetch=0,
            grid=(B // bb,),
            in_specs=[pl.BlockSpec((bb, T, D_in), lambda i: (i, 0, 0))]
                     + weight_specs,
            out_specs=pl.BlockSpec((bb, T, D_out), lambda i: (i, 0, 0)),
        ),
        compiler_params=pltpu.CompilerParams(
            dimension_semantics=("parallel",)),
    )(x_c, wq, bq, wk, bk, wv, bv, wo, bo)


def init_params(key, input_dim, key_dim, value_dim, output_dim):
    """Deterministic Linear-style init; weights stored as (in_dim, out_dim)."""
    ks = jax.random.split(key, 8)

    def linear(kw, kb, fan_in, fan_out):
        bound = 1.0 / math.sqrt(fan_in)
        w = jax.random.uniform(kw, (fan_in, fan_out), jnp.float32, -bound, bound)
        b = jax.random.uniform(kb, (1, fan_out), jnp.float32, -bound, bound)
        return w, b

    wq, bq = linear(ks[0], ks[1], input_dim, key_dim)
    wk, bk = linear(ks[2], ks[3], input_dim, key_dim)
    wv, bv = linear(ks[4], ks[5], input_dim, value_dim)
    wo, bo = linear(ks[6], ks[7], value_dim, output_dim)
    return dict(wq=wq, bq=bq, wk=wk, bk=bk, wv=wv, bv=bv, wo=wo, bo=bo)


def reference(x, p, key_dim, masked=True):
    """Pure-JAX reference mirroring the PyTorch module (eval mode)."""
    q = x @ p["wq"] + p["bq"][0]
    k = x @ p["wk"] + p["bk"][0]
    v = x @ p["wv"] + p["bv"][0]
    scores = (1.0 / math.sqrt(key_dim)) * jnp.einsum("btk,bsk->bts", q, k)
    if masked:
        T = scores.shape[-1]
        tri = jnp.tril(jnp.ones((T, T), bool))
        scores = jnp.where(tri, scores, 0.0)
        scores = jnp.where(scores == 0.0, -jnp.inf, scores)  # PyTorch-faithful
    wts = jax.nn.softmax(scores, axis=2)
    y = jnp.einsum("bts,bsv->btv", wts, v)
    return y @ p["wo"] + p["bo"][0]


if __name__ == "__main__":
    B, T = 2, 8
    input_dim, key_dim, value_dim = 32, 16, 16
    output_dim = input_dim  # output_dim=None -> input_dim

    root = jax.random.PRNGKey(0)
    kx, kp = jax.random.split(root)
    x = jax.random.normal(kx, (B, T, input_dim), jnp.float32)
    params = init_params(kp, input_dim, key_dim, value_dim, output_dim)

    y_ref = reference(x, params, key_dim, masked=True)

    # f32 path, single grid step (whole batch fused into one kernel invocation).
    y = jax.block_until_ready(
        self_attention(x, params, key_dim=key_dim, masked=True))
    assert y.shape == (B, T, output_dim)
    assert jnp.allclose(y, y_ref, atol=1e-4, rtol=1e-4), "f32 mismatch vs reference"

    # Batch-blocked grid (2 parallel steps -> e.g. both v7x TensorCores busy).
    y2 = jax.block_until_ready(
        self_attention(x, params, key_dim=key_dim, masked=True, batch_block=1))
    assert jnp.allclose(y2, y_ref, atol=1e-4, rtol=1e-4), "blocked-grid mismatch"

    # bf16 MXU operands / f32 accumulation path (looser tolerance).
    y3 = jax.block_until_ready(
        self_attention(x, params, key_dim=key_dim, masked=True,
                       compute_dtype=jnp.bfloat16))
    assert jnp.allclose(y3, y_ref, atol=5e-2, rtol=5e-2), "bf16 mismatch"

    print("KERNEL_OK")
</pallas_src>

<mosaic_0001>
module attributes {stable_mosaic.version = 11 : i64} {
  func.func @_self_attention_kernel(%arg0: i32, %arg1: memref<2x8x32xf32, #tpu.memory_space<vmem>>, %arg2: memref<32x16xf32, #tpu.memory_space<vmem>>, %arg3: memref<1x16xf32, #tpu.memory_space<vmem>>, %arg4: memref<32x16xf32, #tpu.memory_space<vmem>>, %arg5: memref<1x16xf32, #tpu.memory_space<vmem>>, %arg6: memref<32x16xf32, #tpu.memory_space<vmem>>, %arg7: memref<1x16xf32, #tpu.memory_space<vmem>>, %arg8: memref<16x32xf32, #tpu.memory_space<vmem>>, %arg9: memref<1x32xf32, #tpu.memory_space<vmem>>, %arg10: memref<2x8x32xf32, #tpu.memory_space<vmem>>) attributes {dimension_semantics = [#tpu.dimension_semantics<parallel>], iteration_bounds = array<i64: 1>, scalar_prefetch = 0 : i64, scratch_operands = 0 : i64, tpu.core_type = #tpu.core_type<tc>, window_params = [{transform_indices = @transform_0, window_bounds = array<i64: 2, 8, 32>}, {pipeline_mode = #tpu.pipeline_mode<synchronous>, transform_indices = @transform_1, window_bounds = array<i64: 32, 16>}, {pipeline_mode = #tpu.pipeline_mode<synchronous>, transform_indices = @transform_2, window_bounds = array<i64: 1, 16>}, {pipeline_mode = #tpu.pipeline_mode<synchronous>, transform_indices = @transform_3, window_bounds = array<i64: 32, 16>}, {pipeline_mode = #tpu.pipeline_mode<synchronous>, transform_indices = @transform_4, window_bounds = array<i64: 1, 16>}, {pipeline_mode = #tpu.pipeline_mode<synchronous>, transform_indices = @transform_5, window_bounds = array<i64: 32, 16>}, {pipeline_mode = #tpu.pipeline_mode<synchronous>, transform_indices = @transform_6, window_bounds = array<i64: 1, 16>}, {pipeline_mode = #tpu.pipeline_mode<synchronous>, transform_indices = @transform_7, window_bounds = array<i64: 16, 32>}, {pipeline_mode = #tpu.pipeline_mode<synchronous>, transform_indices = @transform_8, window_bounds = array<i64: 1, 32>}, {transform_indices = @transform_9, window_bounds = array<i64: 2, 8, 32>}]} {
    %c0 = arith.constant 0 : index
    %c0_0 = arith.constant 0 : index
    %c0_1 = arith.constant 0 : index
    %0 = vector.load %arg1[%c0, %c0_0, %c0_1] : memref<2x8x32xf32, #tpu.memory_space<vmem>>, vector<2x8x32xf32>
    %1 = vector.shape_cast %0 : vector<2x8x32xf32> to vector<16x32xf32>
    %c0_2 = arith.constant 0 : index
    %c0_3 = arith.constant 0 : index
    %2 = vector.load %arg2[%c0_2, %c0_3] : memref<32x16xf32, #tpu.memory_space<vmem>>, vector<32x16xf32>
    %cst = arith.constant dense<0.000000e+00> : vector<16x16xf32>
    %3 = tpu.matmul %1, %2, %cst {dimension_numbers = #tpu.dot_dimension_numbers<[1], [0], [0], [1], [0, 0, 1, 1], [], []>} : vector<16x32xf32>, vector<32x16xf32>, vector<16x16xf32> -> vector<16x16xf32>
    %c0_4 = arith.constant 0 : index
    %c0_5 = arith.constant 0 : index
    %4 = vector.load %arg3[%c0_4, %c0_5] : memref<1x16xf32, #tpu.memory_space<vmem>>, vector<1x16xf32>
    %5 = vector.broadcast %4 : vector<1x16xf32> to vector<16x16xf32>
    %6 = arith.addf %3, %5 : vector<16x16xf32>
    %c0_6 = arith.constant 0 : index
    %c0_7 = arith.constant 0 : index
    %7 = vector.load %arg4[%c0_6, %c0_7] : memref<32x16xf32, #tpu.memory_space<vmem>>, vector<32x16xf32>
    %cst_8 = arith.constant dense<0.000000e+00> : vector<16x16xf32>
    %8 = tpu.matmul %1, %7, %cst_8 {dimension_numbers = #tpu.dot_dimension_numbers<[1], [0], [0], [1], [0, 0, 1, 1], [], []>} : vector<16x32xf32>, vector<32x16xf32>, vector<16x16xf32> -> vector<16x16xf32>
    %c0_9 = arith.constant 0 : index
    %c0_10 = arith.constant 0 : index
    %9 = vector.load %arg5[%c0_9, %c0_10] : memref<1x16xf32, #tpu.memory_space<vmem>>, vector<1x16xf32>
    %10 = vector.broadcast %9 : vector<1x16xf32> to vector<16x16xf32>
    %11 = arith.addf %8, %10 : vector<16x16xf32>
    %c0_11 = arith.constant 0 : index
    %c0_12 = arith.constant 0 : index
    %12 = vector.load %arg6[%c0_11, %c0_12] : memref<32x16xf32, #tpu.memory_space<vmem>>, vector<32x16xf32>
    %cst_13 = arith.constant dense<0.000000e+00> : vector<16x16xf32>
    %13 = tpu.matmul %1, %12, %cst_13 {dimension_numbers = #tpu.dot_dimension_numbers<[1], [0], [0], [1], [0, 0, 1, 1], [], []>} : vector<16x32xf32>, vector<32x16xf32>, vector<16x16xf32> -> vector<16x16xf32>
    %c0_14 = arith.constant 0 : index
    %c0_15 = arith.constant 0 : index
    %14 = vector.load %arg7[%c0_14, %c0_15] : memref<1x16xf32, #tpu.memory_space<vmem>>, vector<1x16xf32>
    %15 = vector.broadcast %14 : vector<1x16xf32> to vector<16x16xf32>
    %16 = arith.addf %13, %15 : vector<16x16xf32>
    %17 = vector.shape_cast %6 : vector<16x16xf32> to vector<2x8x16xf32>
    %18 = vector.shape_cast %11 : vector<16x16xf32> to vector<2x8x16xf32>
    %19 = vector.shape_cast %16 : vector<16x16xf32> to vector<2x8x16xf32>
    "tpu.trace_start"() <{level = 10 : i32, message = "bqd,bkd->bqk"}> : () -> ()
    %cst_16 = arith.constant dense<0.000000e+00> : vector<2x8x8xf32>
    %20 = tpu.matmul %17, %18, %cst_16 {dimension_numbers = #tpu.dot_dimension_numbers<[2], [2], [1], [1], [0, 0, 0, 1, 1, 1], [0], [0]>} : vector<2x8x16xf32>, vector<2x8x16xf32>, vector<2x8x8xf32> -> vector<2x8x8xf32>
    "tpu.trace_stop"() : () -> ()
    %21 = tpu.iota {dimensions = array<i32: 1>} : vector<2x8x8xi32>
    %22 = tpu.iota {dimensions = array<i32: 2>} : vector<2x8x8xi32>
    %23 = arith.cmpi sle, %22, %21 : vector<2x8x8xi32>
    %cst_17 = arith.constant 0xFF800000 : f32
    %24 = vector.broadcast %cst_17 : f32 to vector<2x8x8xf32>
    %25 = arith.select %23, %20, %24 : vector<2x8x8xi1>, vector<2x8x8xf32>
    %cst_18 = arith.constant dense<0xFF800000> : vector<2x8xf32>
    %26 = vector.multi_reduction <maximumf>, %25, %cst_18 [2] : vector<2x8x8xf32> to vector<2x8xf32>
    %27 = vector.shape_cast %26 : vector<2x8xf32> to vector<2x8x1xf32>
    %28 = vector.broadcast %27 : vector<2x8x1xf32> to vector<2x8x8xf32>
    %29 = arith.subf %25, %28 : vector<2x8x8xf32>
    %30 = math.exp %29 : vector<2x8x8xf32>
    %cst_19 = arith.constant dense<0.000000e+00> : vector<2x8xf32>
    %31 = vector.multi_reduction <add>, %30, %cst_19 [2] : vector<2x8x8xf32> to vector<2x8xf32>
    %32 = vector.shape_cast %31 : vector<2x8xf32> to vector<2x8x1xf32>
    %33 = tpu.reciprocal %32 : vector<2x8x1xf32> -> vector<2x8x1xf32>
    %34 = vector.broadcast %33 : vector<2x8x1xf32> to vector<2x8x8xf32>
    %35 = arith.mulf %30, %34 : vector<2x8x8xf32>
    "tpu.trace_start"() <{level = 10 : i32, message = "bqk,bkv->bqv"}> : () -> ()
    %cst_20 = arith.constant dense<0.000000e+00> : vector<2x8x16xf32>
    %36 = tpu.matmul %35, %19, %cst_20 {dimension_numbers = #tpu.dot_dimension_numbers<[2], [1], [1], [2], [0, 0, 0, 1, 1, 2], [0], [0]>} : vector<2x8x8xf32>, vector<2x8x16xf32>, vector<2x8x16xf32> -> vector<2x8x16xf32>
    "tpu.trace_stop"() : () -> ()
    %37 = vector.shape_cast %36 : vector<2x8x16xf32> to vector<16x16xf32>
    %c0_21 = arith.constant 0 : index
    %c0_22 = arith.constant 0 : index
    %38 = vector.load %arg8[%c0_21, %c0_22] : memref<16x32xf32, #tpu.memory_space<vmem>>, vector<16x32xf32>
    %cst_23 = arith.constant dense<0.000000e+00> : vector<16x32xf32>
    %39 = tpu.matmul %37, %38, %cst_23 {dimension_numbers = #tpu.dot_dimension_numbers<[1], [0], [0], [1], [0, 0, 1, 1], [], []>} : vector<16x16xf32>, vector<16x32xf32>, vector<16x32xf32> -> vector<16x32xf32>
    %c0_24 = arith.constant 0 : index
    %c0_25 = arith.constant 0 : index
    %40 = vector.load %arg9[%c0_24, %c0_25] : memref<1x32xf32, #tpu.memory_space<vmem>>, vector<1x32xf32>
    %41 = vector.broadcast %40 : vector<1x32xf32> to vector<16x32xf32>
    %42 = arith.addf %39, %41 : vector<16x32xf32>
    %43 = vector.shape_cast %42 : vector<16x32xf32> to vector<2x8x32xf32>
    %c0_26 = arith.constant 0 : index
    %c0_27 = arith.constant 0 : index
    %c0_28 = arith.constant 0 : index
    %44 = vector.load %arg10[%c0_26, %c0_27, %c0_28] : memref<2x8x32xf32, #tpu.memory_space<vmem>>, vector<2x8x32xf32>
    tpu.vector_store %arg10[%c0_26, %c0_27, %c0_28], %43 {strides = array<i32>} : memref<2x8x32xf32, #tpu.memory_space<vmem>>, vector<2x8x32xf32>,
    return
  }
  func.func @transform_0(%arg0: i32) -> (i32, i32, i32) {
    %c0_i32 = arith.constant 0 : i32
    %c0_i32_0 = arith.constant 0 : i32
    %c0_i32_1 = arith.constant 0 : i32
    return %arg0, %c0_i32, %c0_i32_0 : i32, i32, i32
  }
  func.func @transform_1(%arg0: i32) -> (i32, i32) {
    %c0_i32 = arith.constant 0 : i32
    %c0_i32_0 = arith.constant 0 : i32
    %c0_i32_1 = arith.constant 0 : i32
    return %c0_i32, %c0_i32_0 : i32, i32
  }
  func.func @transform_2(%arg0: i32) -> (i32, i32) {
    %c0_i32 = arith.constant 0 : i32
    %c0_i32_0 = arith.constant 0 : i32
    %c0_i32_1 = arith.constant 0 : i32
    return %c0_i32, %c0_i32_0 : i32, i32
  }
  func.func @transform_3(%arg0: i32) -> (i32, i32) {
    %c0_i32 = arith.constant 0 : i32
    %c0_i32_0 = arith.constant 0 : i32
    %c0_i32_1 = arith.constant 0 : i32
    return %c0_i32, %c0_i32_0 : i32, i32
  }
  func.func @transform_4(%arg0: i32) -> (i32, i32) {
    %c0_i32 = arith.constant 0 : i32
    %c0_i32_0 = arith.constant 0 : i32
    %c0_i32_1 = arith.constant 0 : i32
    return %c0_i32, %c0_i32_0 : i32, i32
  }
  func.func @transform_5(%arg0: i32) -> (i32, i32) {
    %c0_i32 = arith.constant 0 : i32
    %c0_i32_0 = arith.constant 0 : i32
    %c0_i32_1 = arith.constant 0 : i32
    return %c0_i32, %c0_i32_0 : i32, i32
  }
  func.func @transform_6(%arg0: i32) -> (i32, i32) {
    %c0_i32 = arith.constant 0 : i32
    %c0_i32_0 = arith.constant 0 : i32
    %c0_i32_1 = arith.constant 0 : i32
    return %c0_i32, %c0_i32_0 : i32, i32
  }
  func.func @transform_7(%arg0: i32) -> (i32, i32) {
    %c0_i32 = arith.constant 0 : i32
    %c0_i32_0 = arith.constant 0 : i32
    %c0_i32_1 = arith.constant 0 : i32
    return %c0_i32, %c0_i32_0 : i32, i32
  }
  func.func @transform_8(%arg0: i32) -> (i32, i32) {
    %c0_i32 = arith.constant 0 : i32
    %c0_i32_0 = arith.constant 0 : i32
    %c0_i32_1 = arith.constant 0 : i32
    return %c0_i32, %c0_i32_0 : i32, i32
  }
  func.func @transform_9(%arg0: i32) -> (i32, i32, i32) {
    %c0_i32 = arith.constant 0 : i32
    %c0_i32_0 = arith.constant 0 : i32
    %c0_i32_1 = arith.constant 0 : i32
    return %arg0, %c0_i32, %c0_i32_0 : i32, i32, i32
  }
}

</mosaic_0001>

<llo_original>
// kernel: tpu_custom_call.1
$region0: #{tpu_custom_call.1}
  #allocation0 [shape = 'u32[]', space=smem, size = 0x4, offset = 0x4, fixed_abs, tag = 'smem constant byte address 0x4 - core index']
  #allocation1 [shape = 'u32[144,128]{1,0:T(1,128)}', space=vmem, size = 0x12000, scoped, tag = 'internal scratch']
  %s0 = inlined_call_operand.vmem [shape: f32[2,8,32], index: 0, kind: input, shape index: {}]
  %s1 = inlined_call_operand.vmem [shape: f32[32,16], index: 1, kind: input, shape index: {}]
  %s2 = inlined_call_operand.vmem [shape: f32[1,16], index: 2, kind: input, shape index: {}]
  %s3 = inlined_call_operand.vmem [shape: f32[32,16], index: 3, kind: input, shape index: {}]
  %s4 = inlined_call_operand.vmem [shape: f32[1,16], index: 4, kind: input, shape index: {}]
  %s5 = inlined_call_operand.vmem [shape: f32[32,16], index: 5, kind: input, shape index: {}]
  %s6 = inlined_call_operand.vmem [shape: f32[1,16], index: 6, kind: input, shape index: {}]
  %s7 = inlined_call_operand.vmem [shape: f32[16,32], index: 7, kind: input, shape index: {}]
  %s8 = inlined_call_operand.vmem [shape: f32[1,32], index: 8, kind: input, shape index: {}]
  %s9 = inlined_call_operand.hbm [shape: f32[2,8,32], index: 9, kind: output, shape index: {}]
  %s10 = sld [smem:[#allocation0]]
  $region46: #{tpu_custom_call.1} parent=0
    _
  %s12 = ssub.s32 1, %s10
  %s13 = scalar_select 0, %s12, %s10
  $region1: #{tpu_custom_call.1} parent=0
    #allocation2 [shape = 'u8[8192]{0}', space=vmem, size = 0x2000, scoped, tag = 'output window, operand 0, single buffered']
    #allocation3 [shape = 's32[1]{0}', space=sflag, size = 0x4, scoped, tag = 'scoped memory for tpu_custom_call.1']
    %14 = vsyncpa [#allocation3], 0
    // Predicated region
    $region2: #{tpu_custom_call.1} parent=1 // pred_check
      _
    $region3: #{tpu_custom_call.1} parent=1 // pred_check_branch
      %16 = sbr.rel (0) target = $region5
    $region4: #{tpu_custom_call.1} parent=1 // pred_region
      _
    $region5: #{tpu_custom_call.1} parent=1 // pred_fallthru
      _
    // Predicated region
    $region6: #{tpu_custom_call.1} parent=1 // pred_check
      _
    $region7: #{tpu_custom_call.1} parent=1 // pred_check_branch
      %18 = sbr.rel (0) target = $region9
    $region8: #{tpu_custom_call.1} parent=1 // pred_region
      _
    $region9: #{tpu_custom_call.1} parent=1 // pred_fallthru
      _
    // Predicated region
    $region10: #{tpu_custom_call.1} parent=1 // pred_check
      _
    $region11: #{tpu_custom_call.1} parent=1 // pred_check_branch
      %20 = sbr.rel (0) target = $region13
    $region12: #{tpu_custom_call.1} parent=1 // pred_region
      _
    $region13: #{tpu_custom_call.1} parent=1 // pred_fallthru
      _
    // Predicated region
    $region14: #{tpu_custom_call.1} parent=1 // pred_check
      _
    $region15: #{tpu_custom_call.1} parent=1 // pred_check_branch
      %22 = sbr.rel (0) target = $region17
    $region16: #{tpu_custom_call.1} parent=1 // pred_region
      _
    $region17: #{tpu_custom_call.1} parent=1 // pred_fallthru
      _
    // Predicated region
    $region18: #{tpu_custom_call.1} parent=1 // pred_check
      _
    $region19: #{tpu_custom_call.1} parent=1 // pred_check_branch
      %24 = sbr.rel (0) target = $region21
    $region20: #{tpu_custom_call.1} parent=1 // pred_region
      _
    $region21: #{tpu_custom_call.1} parent=1 // pred_fallthru
      _
    // Predicated region
    $region22: #{tpu_custom_call.1} parent=1 // pred_check
      _
    $region23: #{tpu_custom_call.1} parent=1 // pred_check_branch
      %26 = sbr.rel (0) target = $region25
    $region24: #{tpu_custom_call.1} parent=1 // pred_region
      _
    $region25: #{tpu_custom_call.1} parent=1 // pred_fallthru
      _
    // Predicated region
    $region26: #{tpu_custom_call.1} parent=1 // pred_check
      _
    $region27: #{tpu_custom_call.1} parent=1 // pred_check_branch
      %28 = sbr.rel (0) target = $region29
    $region28: #{tpu_custom_call.1} parent=1 // pred_region
      _
    $region29: #{tpu_custom_call.1} parent=1 // pred_fallthru
      _
    // Predicated region
    $region30: #{tpu_custom_call.1} parent=1 // pred_check
      _
    $region31: #{tpu_custom_call.1} parent=1 // pred_check_branch
      %30 = sbr.rel (0) target = $region33
    $region32: #{tpu_custom_call.1} parent=1 // pred_region
      _
    $region33: #{tpu_custom_call.1} parent=1 // pred_fallthru
      _
    // Predicated region
    $region34: #{tpu_custom_call.1} parent=1 // pred_check
      _
    $region35: #{tpu_custom_call.1} parent=1 // pred_check_branch
      %32 = sbr.rel (0) target = $region37
    $region36: #{tpu_custom_call.1} parent=1 // pred_region
      _
    $region37: #{tpu_custom_call.1} parent=1 // pred_fallthru
      _
    %v33 = vld [vmem:[%s0] sm:$0xff]
    %v34 = vld [vmem:[%s0 + $0x8] sm:$0xff]
    %v35 = vld [vmem:[%s1] sm:$0xff]
    %v36 = vld [vmem:[%s1 + $0x8] sm:$0xff]
    %v37 = vld [vmem:[%s1 + $0x10] sm:$0xff]
    %v38 = vld [vmem:[%s1 + $0x18] sm:$0xff]
    %v39 = vld [vmem:[%s2] sm:$0x1]
    %v41 = vlaneseq
    %v42 = vshrl.u32 %v41, 7
    %v43 = vsub.s32 0, %v42
    %v44 = vrot.slane %v39, %v43
    %vm46 = vcmask 261120
    %v48 = vsel %vm46, %v33, 0
    %v51 = vsel %vm46, %v34, 0
    %53 = vmatprep.subr.mxu0 0.0
    %54 = vmatpush1.msra.mxu0 %v35
    %55 = vmatprep.subr.mxu0 0.0
    %56 = vmatpush1.msra.mxu0 %v36
    %57 = vmatprep.subr.mxu0 0.0
    %58 = vmatpush1.msra.mxu0 %v37
    %59 = vmatprep.subr.mxu0 0.0
    %60 = vmatpush1.msra.mxu0 %v38
    %61 = vmatprep.subr.mxu0 0.0
    %62 = vmatpush1.msra.mxu0 0.0
    %63 = vmatprep.subr.mxu0 0.0
    %64 = vmatpush1.msra.mxu0 0.0
    %65 = vmatprep.subr.mxu0 0.0
    %66 = vmatpush1.msra.mxu0 0.0
    %67 = vmatprep.subr.mxu0 0.0
    %68 = vmatpush1.msra.mxu0 0.0
    %69 = vmatprep.subr.mxu0 0.0
    %70 = vmatpush1.msra.mxu0 0.0
    %71 = vmatprep.subr.mxu0 0.0
    %72 = vmatpush1.msra.mxu0 0.0
    %73 = vmatprep.subr.mxu0 0.0
    %74 = vmatpush1.msra.mxu0 0.0
    %75 = vmatprep.subr.mxu0 0.0
    %76 = vmatpush1.msra.mxu0 0.0
    %77 = vmatprep.subr.mxu0 0.0
    %78 = vmatpush1.msra.mxu0 0.0
    %79 = vmatprep.subr.mxu0 0.0
    %80 = vmatpush1.msra.mxu0 0.0
    %81 = vmatprep.subr.mxu0 0.0
    %82 = vmatpush1.msra.mxu0 0.0
    %83 = vmatprep.subr.mxu0 0.0
    %84 = vmatpush1.msra.mxu0 0.0
    %85 = vmatprep.subr.mxu0 0.0
    %86 = vmatpush1.msra.mxu0 0.0
    %87 = vmatprep.subr.mxu0 0.0
    %88 = vmatpush1.msra.mxu0 0.0
    %89 = vmatprep.subr.mxu0 0.0
    %90 = vmatpush1.msra.mxu0 0.0
    %91 = vmatprep.subr.mxu0 0.0
    %92 = vmatpush1.msra.mxu0 0.0
    %93 = vmatprep.subr.mxu0 0.0
    %94 = vmatpush1.msra.mxu0 0.0
    %95 = vmatprep.subr.mxu0 0.0
    %96 = vmatpush1.msra.mxu0 0.0
    %97 = vmatprep.subr.mxu0 0.0
    %98 = vmatpush1.msra.mxu0 0.0
    %99 = vmatprep.subr.mxu0 0.0
    %100 = vmatpush1.msra.mxu0 0.0
    %101 = vmatprep.subr.mxu0 0.0
    %102 = vmatpush1.msra.mxu0 0.0
    %103 = vmatprep.subr.mxu0 0.0
    %104 = vmatpush1.msra.mxu0 0.0
    %105 = vmatprep.subr.mxu0 0.0
    %106 = vmatpush1.msra.mxu0 0.0
    %107 = vmatprep.subr.mxu0 0.0
    %108 = vmatpush1.msra.mxu0 0.0
    %109 = vmatprep.subr.mxu0 0.0
    %110 = vmatpush1.msra.mxu0 0.0
    %111 = vmatprep.subr.mxu0 0.0
    %112 = vmatpush1.msra.mxu0 0.0
    %113 = vmatprep.subr.mxu0 0.0
    %114 = vmatpush1.msra.mxu0 0.0
    %115 = vmatprep.subr.mxu0 0.0
    %116 = vmatpush1.msra.mxu0 0.0
    %117 = vmatprep.mubr.f32.mxu0 0.0
    %118 = vmatmul.mubr.f32.gmra.mrb[0].mxu0 %v48
    %v119 = vpop.f32.mrb[0].mxu0
    %v120 = vadd.f32 %v44, %v119
    %v121 = vpop.f32.mrb[0].mxu0
    %122 = vmatprep.mubr.f32.mxu0 0.0
    %123 = vmatmul.mubr.f32.gmra.mrb[0].mxu0 %v51
    %v124 = vpop.f32.mrb[0].mxu0
    %v125 = vadd.f32 %v44, %v124
    %v126 = vpop.f32.mrb[0].mxu0
    %127 = vdwg.mxu0
    %v128 = vld [vmem:[%s3] sm:$0xff]
    %v129 = vld [vmem:[%s3 + $0x8] sm:$0xff]
    %v130 = vld [vmem:[%s3 + $0x10] sm:$0xff]
    %v131 = vld [vmem:[%s3 + $0x18] sm:$0xff]
    %v132 = vld [vmem:[%s4] sm:$0x1]
    %v134 = vlaneseq
    %v135 = vshrl.u32 %v134, 7
    %v136 = vsub.s32 0, %v135
    %v137 = vrot.slane %v132, %v136
    %139 = vmatprep.subr.mxu0 0.0
    %140 = vmatpush1.msra.mxu0 %v128
    %141 = vmatprep.subr.mxu0 0.0
    %142 = vmatpush1.msra.mxu0 %v129
    %143 = vmatprep.subr.mxu0 0.0
    %144 = vmatpush1.msra.mxu0 %v130
    %145 = vmatprep.subr.mxu0 0.0
    %146 = vmatpush1.msra.mxu0 %v131
    %147 = vmatprep.subr.mxu0 0.0
    %148 = vmatpush1.msra.mxu0 0.0
    %149 = vmatprep.subr.mxu0 0.0
    %150 = vmatpush1.msra.mxu0 0.0
    %151 = vmatprep.subr.mxu0 0.0
    %152 = vmatpush1.msra.mxu0 0.0
    %153 = vmatprep.subr.mxu0 0.0
    %154 = vmatpush1.msra.mxu0 0.0
    %155 = vmatprep.subr.mxu0 0.0
    %156 = vmatpush1.msra.mxu0 0.0
    %157 = vmatprep.subr.mxu0 0.0
    %158 = vmatpush1.msra.mxu0 0.0
    %159 = vmatprep.subr.mxu0 0.0
    %160 = vmatpush1.msra.mxu0 0.0
    %161 = vmatprep.subr.mxu0 0.0
    %162 = vmatpush1.msra.mxu0 0.0
    %163 = vmatprep.subr.mxu0 0.0
    %164 = vmatpush1.msra.mxu0 0.0
    %165 = vmatprep.subr.mxu0 0.0
    %166 = vmatpush1.msra.mxu0 0.0
    %167 = vmatprep.subr.mxu0 0.0
    %168 = vmatpush1.msra.mxu0 0.0
    %169 = vmatprep.subr.mxu0 0.0
    %170 = vmatpush1.msra.mxu0 0.0
    %171 = vmatprep.subr.mxu0 0.0
    %172 = vmatpush1.msra.mxu0 0.0
    %173 = vmatprep.subr.mxu0 0.0
    %174 = vmatpush1.msra.mxu0 0.0
    %175 = vmatprep.subr.mxu0 0.0
    %176 = vmatpush1.msra.mxu0 0.0
    %177 = vmatprep.subr.mxu0 0.0
    %178 = vmatpush1.msra.mxu0 0.0
    %179 = vmatprep.subr.mxu0 0.0
    %180 = vmatpush1.msra.mxu0 0.0
    %181 = vmatprep.subr.mxu0 0.0
    %182 = vmatpush1.msra.mxu0 0.0
    %183 = vmatprep.subr.mxu0 0.0
    %184 = vmatpush1.msra.mxu0 0.0
    %185 = vmatprep.subr.mxu0 0.0
    %186 = vmatpush1.msra.mxu0 0.0
    %187 = vmatprep.subr.mxu0 0.0
    %188 = vmatpush1.msra.mxu0 0.0
    %189 = vmatprep.subr.mxu0 0.0
    %190 = vmatpush1.msra.mxu0 0.0
    %191 = vmatprep.subr.mxu0 0.0
    %192 = vmatpush1.msra.mxu0 0.0
    %193 = vmatprep.subr.mxu0 0.0
    %194 = vmatpush1.msra.mxu0 0.0
    %195 = vmatprep.subr.mxu0 0.0
    %196 = vmatpush1.msra.mxu0 0.0
    %197 = vmatprep.subr.mxu0 0.0
    %198 = vmatpush1.msra.mxu0 0.0
    %199 = vmatprep.subr.mxu0 0.0
    %200 = vmatpush1.msra.mxu0 0.0
    %201 = vmatprep.subr.mxu0 0.0
    %202 = vmatpush1.msra.mxu0 0.0
    %203 = vmatprep.mubr.f32.mxu0 0.0
    %204 = vmatmul.mubr.f32.gmra.mrb[0].mxu0 %v48
    %v205 = vpop.f32.mrb[0].mxu0
    %v206 = vadd.f32 %v137, %v205
    %v207 = vpop.f32.mrb[0].mxu0
    %208 = vmatprep.mubr.f32.mxu0 0.0
    %209 = vmatmul.mubr.f32.gmra.mrb[0].mxu0 %v51
    %v210 = vpop.f32.mrb[0].mxu0
    %v211 = vadd.f32 %v137, %v210
    %v212 = vpop.f32.mrb[0].mxu0
    %213 = vdwg.mxu0
    %v214 = vld [vmem:[%s5] sm:$0xff]
    %v215 = vld [vmem:[%s5 + $0x8] sm:$0xff]
    %v216 = vld [vmem:[%s5 + $0x10] sm:$0xff]
    %v217 = vld [vmem:[%s5 + $0x18] sm:$0xff]
    %v218 = vld [vmem:[%s6] sm:$0x1]
    %v220 = vlaneseq
    %v221 = vshrl.u32 %v220, 7
    %v222 = vsub.s32 0, %v221
    %v223 = vrot.slane %v218, %v222
    %225 = vmatprep.subr.mxu0 0.0
    %226 = vmatpush1.msra.mxu0 %v214
    %227 = vmatprep.subr.mxu0 0.0
    %228 = vmatpush1.msra.mxu0 %v215
    %229 = vmatprep.subr.mxu0 0.0
    %230 = vmatpush1.msra.mxu0 %v216
    %231 = vmatprep.subr.mxu0 0.0
    %232 = vmatpush1.msra.mxu0 %v217
    %233 = vmatprep.subr.mxu0 0.0
    %234 = vmatpush1.msra.mxu0 0.0
    %235 = vmatprep.subr.mxu0 0.0
    %236 = vmatpush1.msra.mxu0 0.0
    %237 = vmatprep.subr.mxu0 0.0
    %238 = vmatpush1.msra.mxu0 0.0
    %239 = vmatprep.subr.mxu0 0.0
    %240 = vmatpush1.msra.mxu0 0.0
    %241 = vmatprep.subr.mxu0 0.0
    %242 = vmatpush1.msra.mxu0 0.0
    %243 = vmatprep.subr.mxu0 0.0
    %244 = vmatpush1.msra.mxu0 0.0
    %245 = vmatprep.subr.mxu0 0.0
    %246 = vmatpush1.msra.mxu0 0.0
    %247 = vmatprep.subr.mxu0 0.0
    %248 = vmatpush1.msra.mxu0 0.0
    %249 = vmatprep.subr.mxu0 0.0
    %250 = vmatpush1.msra.mxu0 0.0
    %251 = vmatprep.subr.mxu0 0.0
    %252 = vmatpush1.msra.mxu0 0.0
    %253 = vmatprep.subr.mxu0 0.0
    %254 = vmatpush1.msra.mxu0 0.0
    %255 = vmatprep.subr.mxu0 0.0
    %256 = vmatpush1.msra.mxu0 0.0
    %257 = vmatprep.subr.mxu0 0.0
    %258 = vmatpush1.msra.mxu0 0.0
    %259 = vmatprep.subr.mxu0 0.0
    %260 = vmatpush1.msra.mxu0 0.0
    %261 = vmatprep.subr.mxu0 0.0
    %262 = vmatpush1.msra.mxu0 0.0
    %263 = vmatprep.subr.mxu0 0.0
    %264 = vmatpush1.msra.mxu0 0.0
    %265 = vmatprep.subr.mxu0 0.0
    %266 = vmatpush1.msra.mxu0 0.0
    %267 = vmatprep.subr.mxu0 0.0
    %268 = vmatpush1.msra.mxu0 0.0
    %269 = vmatprep.subr.mxu0 0.0
    %270 = vmatpush1.msra.mxu0 0.0
    %271 = vmatprep.subr.mxu0 0.0
    %272 = vmatpush1.msra.mxu0 0.0
    %273 = vmatprep.subr.mxu0 0.0
    %274 = vmatpush1.msra.mxu0 0.0
    %275 = vmatprep.subr.mxu0 0.0
    %276 = vmatpush1.msra.mxu0 0.0
    %277 = vmatprep.subr.mxu0 0.0
    %278 = vmatpush1.msra.mxu0 0.0
    %279 = vmatprep.subr.mxu0 0.0
    %280 = vmatpush1.msra.mxu0 0.0
    %281 = vmatprep.subr.mxu0 0.0
    %282 = vmatpush1.msra.mxu0 0.0
    %283 = vmatprep.subr.mxu0 0.0
    %284 = vmatpush1.msra.mxu0 0.0
    %285 = vmatprep.subr.mxu0 0.0
    %286 = vmatpush1.msra.mxu0 0.0
    %287 = vmatprep.subr.mxu0 0.0
    %288 = vmatpush1.msra.mxu0 0.0
    %289 = vmatprep.mubr.f32.mxu0 0.0
    %290 = vmatmul.mubr.f32.gmra.mrb[0].mxu0 %v48
    %v291 = vpop.f32.mrb[0].mxu0
    %v292 = vadd.f32 %v223, %v291
    %v293 = vpop.f32.mrb[0].mxu0
    %294 = vmatprep.mubr.f32.mxu0 0.0
    %295 = vmatmul.mubr.f32.gmra.mrb[0].mxu0 %v51
    %v296 = vpop.f32.mrb[0].mxu0
    %v297 = vadd.f32 %v223, %v296
    %v298 = vpop.f32.mrb[0].mxu0
    %299 = vdwg.mxu0
    %vm300 = vcmask 130048
    %v302 = vsel %vm300, %v120, 0
    %v305 = vsel %vm300, %v206, 0
    %307 = vmatprep.subr.mxu0 0.0
    %308 = vmatpush1.xpose.msra.mxu0 %v305
    %309 = vmatprep.subr.mxu0 0.0
    %310 = vmatpush1.xpose.msra.mxu0 0.0
    %311 = vmatprep.subr.mxu0 0.0
    %312 = vmatpush1.xpose.msra.mxu0 0.0
    %313 = vmatprep.subr.mxu0 0.0
    %314 = vmatpush1.xpose.msra.mxu0 0.0
    %315 = vmatprep.subr.mxu0 0.0
    %316 = vmatpush1.xpose.msra.mxu0 0.0
    %317 = vmatprep.subr.mxu0 0.0
    %318 = vmatpush1.xpose.msra.mxu0 0.0
    %319 = vmatprep.subr.mxu0 0.0
    %320 = vmatpush1.xpose.msra.mxu0 0.0
    %321 = vmatprep.subr.mxu0 0.0
    %322 = vmatpush1.xpose.msra.mxu0 0.0
    %323 = vmatprep.subr.mxu0 0.0
    %324 = vmatpush1.xpose.msra.mxu0 0.0
    %325 = vmatprep.subr.mxu0 0.0
    %326 = vmatpush1.xpose.msra.mxu0 0.0
    %327 = vmatprep.subr.mxu0 0.0
    %328 = vmatpush1.xpose.msra.mxu0 0.0
    %329 = vmatprep.subr.mxu0 0.0
    %330 = vmatpush1.xpose.msra.mxu0 0.0
    %331 = vmatprep.subr.mxu0 0.0
    %332 = vmatpush1.xpose.msra.mxu0 0.0
    %333 = vmatprep.subr.mxu0 0.0
    %334 = vmatpush1.xpose.msra.mxu0 0.0
    %335 = vmatprep.subr.mxu0 0.0
    %336 = vmatpush1.xpose.msra.mxu0 0.0
    %337 = vmatprep.subr.mxu0 0.0
    %338 = vmatpush1.xpose.msra.mxu0 0.0
    %339 = vmatprep.subr.mxu0 0.0
    %340 = vmatpush1.xpose.msra.mxu0 0.0
    %341 = vmatprep.subr.mxu0 0.0
    %342 = vmatpush1.xpose.msra.mxu0 0.0
    %343 = vmatprep.subr.mxu0 0.0
    %344 = vmatpush1.xpose.msra.mxu0 0.0
    %345 = vmatprep.subr.mxu0 0.0
    %346 = vmatpush1.xpose.msra.mxu0 0.0
    %347 = vmatprep.subr.mxu0 0.0
    %348 = vmatpush1.xpose.msra.mxu0 0.0
    %349 = vmatprep.subr.mxu0 0.0
    %350 = vmatpush1.xpose.msra.mxu0 0.0
    %351 = vmatprep.subr.mxu0 0.0
    %352 = vmatpush1.xpose.msra.mxu0 0.0
    %353 = vmatprep.subr.mxu0 0.0
    %354 = vmatpush1.xpose.msra.mxu0 0.0
    %355 = vmatprep.subr.mxu0 0.0
    %356 = vmatpush1.xpose.msra.mxu0 0.0
    %357 = vmatprep.subr.mxu0 0.0
    %358 = vmatpush1.xpose.msra.mxu0 0.0
    %359 = vmatprep.subr.mxu0 0.0
    %360 = vmatpush1.xpose.msra.mxu0 0.0
    %361 = vmatprep.subr.mxu0 0.0
    %362 = vmatpush1.xpose.msra.mxu0 0.0
    %363 = vmatprep.subr.mxu0 0.0
    %364 = vmatpush1.xpose.msra.mxu0 0.0
    %365 = vmatprep.subr.mxu0 0.0
    %366 = vmatpush1.xpose.msra.mxu0 0.0
    %367 = vmatprep.subr.mxu0 0.0
    %368 = vmatpush1.xpose.msra.mxu0 0.0
    %369 = vmatprep.subr.mxu0 0.0
    %370 = vmatpush1.xpose.msra.mxu0 0.0
    %371 = vmatprep.mubr.f32.mxu0 0.0
    %372 = vmatmul.mubr.f32.gmra.mrb[0].mxu0 %v302
    %v373 = vpop.f32.mrb[0].mxu0
    %v374 = vadd.f32 0.0, %v373
    %v375 = vpop.f32.mrb[0].mxu0
    %376 = vdwg.mxu0
    %v378 = vsel %vm300, %v125, 0
    %v381 = vsel %vm300, %v211, 0
    %383 = vmatprep.subr.mxu0 0.0
    %384 = vmatpush1.xpose.msra.mxu0 %v381
    %385 = vmatprep.subr.mxu0 0.0
    %386 = vmatpush1.xpose.msra.mxu0 0.0
    %387 = vmatprep.subr.mxu0 0.0
    %388 = vmatpush1.xpose.msra.mxu0 0.0
    %389 = vmatprep.subr.mxu0 0.0
    %390 = vmatpush1.xpose.msra.mxu0 0.0
    %391 = vmatprep.subr.mxu0 0.0
    %392 = vmatpush1.xpose.msra.mxu0 0.0
    %393 = vmatprep.subr.mxu0 0.0
    %394 = vmatpush1.xpose.msra.mxu0 0.0
    %395 = vmatprep.subr.mxu0 0.0
    %396 = vmatpush1.xpose.msra.mxu0 0.0
    %397 = vmatprep.subr.mxu0 0.0
    %398 = vmatpush1.xpose.msra.mxu0 0.0
    %399 = vmatprep.subr.mxu0 0.0
    %400 = vmatpush1.xpose.msra.mxu0 0.0
    %401 = vmatprep.subr.mxu0 0.0
    %402 = vmatpush1.xpose.msra.mxu0 0.0
    %403 = vmatprep.subr.mxu0 0.0
    %404 = vmatpush1.xpose.msra.mxu0 0.0
    %405 = vmatprep.subr.mxu0 0.0
    %406 = vmatpush1.xpose.msra.mxu0 0.0
    %407 = vmatprep.subr.mxu0 0.0
    %408 = vmatpush1.xpose.msra.mxu0 0.0
    %409 = vmatprep.subr.mxu0 0.0
    %410 = vmatpush1.xpose.msra.mxu0 0.0
    %411 = vmatprep.subr.mxu0 0.0
    %412 = vmatpush1.xpose.msra.mxu0 0.0
    %413 = vmatprep.subr.mxu0 0.0
    %414 = vmatpush1.xpose.msra.mxu0 0.0
    %415 = vmatprep.subr.mxu0 0.0
    %416 = vmatpush1.xpose.msra.mxu0 0.0
    %417 = vmatprep.subr.mxu0 0.0
    %418 = vmatpush1.xpose.msra.mxu0 0.0
    %419 = vmatprep.subr.mxu0 0.0
    %420 = vmatpush1.xpose.msra.mxu0 0.0
    %421 = vmatprep.subr.mxu0 0.0
    %422 = vmatpush1.xpose.msra.mxu0 0.0
    %423 = vmatprep.subr.mxu0 0.0
    %424 = vmatpush1.xpose.msra.mxu0 0.0
    %425 = vmatprep.subr.mxu0 0.0
    %426 = vmatpush1.xpose.msra.mxu0 0.0
    %427 = vmatprep.subr.mxu0 0.0
    %428 = vmatpush1.xpose.msra.mxu0 0.0
    %429 = vmatprep.subr.mxu0 0.0
    %430 = vmatpush1.xpose.msra.mxu0 0.0
    %431 = vmatprep.subr.mxu0 0.0
    %432 = vmatpush1.xpose.msra.mxu0 0.0
    %433 = vmatprep.subr.mxu0 0.0
    %434 = vmatpush1.xpose.msra.mxu0 0.0
    %435 = vmatprep.subr.mxu0 0.0
    %436 = vmatpush1.xpose.msra.mxu0 0.0
    %437 = vmatprep.subr.mxu0 0.0
    %438 = vmatpush1.xpose.msra.mxu0 0.0
    %439 = vmatprep.subr.mxu0 0.0
    %440 = vmatpush1.xpose.msra.mxu0 0.0
    %441 = vmatprep.subr.mxu0 0.0
    %442 = vmatpush1.xpose.msra.mxu0 0.0
    %443 = vmatprep.subr.mxu0 0.0
    %444 = vmatpush1.xpose.msra.mxu0 0.0
    %445 = vmatprep.subr.mxu0 0.0
    %446 = vmatpush1.xpose.msra.mxu0 0.0
    %447 = vmatprep.mubr.f32.mxu0 0.0
    %448 = vmatmul.mubr.f32.gmra.mrb[0].mxu0 %v378
    %v449 = vpop.f32.mrb[0].mxu0
    %v450 = vadd.f32 0.0, %v449
    %v451 = vpop.f32.mrb[0].mxu0
    %452 = vdwg.mxu0
    %v453 = vlaneseq
    %v454 = vshrl.u32 %v453, 7
    %v455 = vlaneseq
    %v456 = vand.u32 %v455, 127
    %vm457 = vcmp.le.s32.totalorder %v456, %v454
    %v458 = vsel %vm457, %v374, -inf
    %v459 = vsel %vm457, %v450, -inf
    %vm460 = vcmask 64512
    %v461 = vsel %vm460, %v458, -inf
    %462 = vmax.xlane.f32.xlu0 %v461
    %v463 = vpop.xlane.xlu0 %462
    %v464 = vsel %vm460, %v459, -inf
    %465 = vmax.xlane.f32.xlu0 %v464
    %v466 = vpop.xlane.xlu0 %465
    %v467 = vsub.f32 %v458, %v463
    %v468 = vsub.f32 %v459, %v466
    %v469 = vmul.f32 %v467, 1.442695
    %v470 = vpow.pop %v469
    %v471 = vmul.f32 %v468, 1.442695
    %v472 = vpow.pop %v471
    %v473 = vsel %vm460, %v470, 0.0
    %474 = vadd.xlane.f32.xlu0 %v473
    %v475 = vpop.xlane.xlu0 %474
    %v476 = vsel %vm460, %v472, 0.0
    %477 = vadd.xlane.f32.xlu0 %v476
    %v478 = vpop.xlane.xlu0 %477
    %v479 = vrcp.pop %v475
    %v480 = vrcp.pop %v478
    %v481 = vmul.f32 %v470, %v479
    %v482 = vmul.f32 %v472, %v480
    %v484 = vsel %vm460, %v481, 0
    %486 = vmatprep.subr.mxu0 0.0
    %487 = vmatpush1.msra.mxu0 %v292
    %488 = vmatprep.subr.mxu0 0.0
    %489 = vmatpush1.msra.mxu0 0.0
    %490 = vmatprep.subr.mxu0 0.0
    %491 = vmatpush1.msra.mxu0 0.0
    %492 = vmatprep.subr.mxu0 0.0
    %493 = vmatpush1.msra.mxu0 0.0
    %494 = vmatprep.subr.mxu0 0.0
    %495 = vmatpush1.msra.mxu0 0.0
    %496 = vmatprep.subr.mxu0 0.0
    %497 = vmatpush1.msra.mxu0 0.0
    %498 = vmatprep.subr.mxu0 0.0
    %499 = vmatpush1.msra.mxu0 0.0
    %500 = vmatprep.subr.mxu0 0.0
    %501 = vmatpush1.msra.mxu0 0.0
    %502 = vmatprep.subr.mxu0 0.0
    %503 = vmatpush1.msra.mxu0 0.0
    %504 = vmatprep.subr.mxu0 0.0
    %505 = vmatpush1.msra.mxu0 0.0
    %506 = vmatprep.subr.mxu0 0.0
    %507 = vmatpush1.msra.mxu0 0.0
    %508 = vmatprep.subr.mxu0 0.0
    %509 = vmatpush1.msra.mxu0 0.0
    %510 = vmatprep.subr.mxu0 0.0
    %511 = vmatpush1.msra.mxu0 0.0
    %512 = vmatprep.subr.mxu0 0.0
    %513 = vmatpush1.msra.mxu0 0.0
    %514 = vmatprep.subr.mxu0 0.0
    %515 = vmatpush1.msra.mxu0 0.0
    %516 = vmatprep.subr.mxu0 0.0
    %517 = vmatpush1.msra.mxu0 0.0
    %518 = vmatprep.subr.mxu0 0.0
    %519 = vmatpush1.msra.mxu0 0.0
    %520 = vmatprep.subr.mxu0 0.0
    %521 = vmatpush1.msra.mxu0 0.0
    %522 = vmatprep.subr.mxu0 0.0
    %523 = vmatpush1.msra.mxu0 0.0
    %524 = vmatprep.subr.mxu0 0.0
    %525 = vmatpush1.msra.mxu0 0.0
    %526 = vmatprep.subr.mxu0 0.0
    %527 = vmatpush1.msra.mxu0 0.0
    %528 = vmatprep.subr.mxu0 0.0
    %529 = vmatpush1.msra.mxu0 0.0
    %530 = vmatprep.subr.mxu0 0.0
    %531 = vmatpush1.msra.mxu0 0.0
    %532 = vmatprep.subr.mxu0 0.0
    %533 = vmatpush1.msra.mxu0 0.0
    %534 = vmatprep.subr.mxu0 0.0
    %535 = vmatpush1.msra.mxu0 0.0
    %536 = vmatprep.subr.mxu0 0.0
    %537 = vmatpush1.msra.mxu0 0.0
    %538 = vmatprep.subr.mxu0 0.0
    %539 = vmatpush1.msra.mxu0 0.0
    %540 = vmatprep.subr.mxu0 0.0
    %541 = vmatpush1.msra.mxu0 0.0
    %542 = vmatprep.subr.mxu0 0.0
    %543 = vmatpush1.msra.mxu0 0.0
    %544 = vmatprep.subr.mxu0 0.0
    %545 = vmatpush1.msra.mxu0 0.0
    %546 = vmatprep.subr.mxu0 0.0
    %547 = vmatpush1.msra.mxu0 0.0
    %548 = vmatprep.subr.mxu0 0.0
    %549 = vmatpush1.msra.mxu0 0.0
    %550 = vmatprep.mubr.f32.mxu0 0.0
    %551 = vmatmul.mubr.f32.gmra.mrb[0].mxu0 %v484
    %v552 = vpop.f32.mrb[0].mxu0
    %v553 = vadd.f32 0.0, %v552
    %v554 = vpop.f32.mrb[0].mxu0
    %555 = vdwg.mxu0
    %v557 = vsel %vm460, %v482, 0
    %559 = vmatprep.subr.mxu0 0.0
    %560 = vmatpush1.msra.mxu0 %v297
    %561 = vmatprep.subr.mxu0 0.0
    %562 = vmatpush1.msra.mxu0 0.0
    %563 = vmatprep.subr.mxu0 0.0
    %564 = vmatpush1.msra.mxu0 0.0
    %565 = vmatprep.subr.mxu0 0.0
    %566 = vmatpush1.msra.mxu0 0.0
    %567 = vmatprep.subr.mxu0 0.0
    %568 = vmatpush1.msra.mxu0 0.0
    %569 = vmatprep.subr.mxu0 0.0
    %570 = vmatpush1.msra.mxu0 0.0
    %571 = vmatprep.subr.mxu0 0.0
    %572 = vmatpush1.msra.mxu0 0.0
    %573 = vmatprep.subr.mxu0 0.0
    %574 = vmatpush1.msra.mxu0 0.0
    %575 = vmatprep.subr.mxu0 0.0
    %576 = vmatpush1.msra.mxu0 0.0
    %577 = vmatprep.subr.mxu0 0.0
    %578 = vmatpush1.msra.mxu0 0.0
    %579 = vmatprep.subr.mxu0 0.0
    %580 = vmatpush1.msra.mxu0 0.0
    %581 = vmatprep.subr.mxu0 0.0
    %582 = vmatpush1.msra.mxu0 0.0
    %583 = vmatprep.subr.mxu0 0.0
    %584 = vmatpush1.msra.mxu0 0.0
    %585 = vmatprep.subr.mxu0 0.0
    %586 = vmatpush1.msra.mxu0 0.0
    %587 = vmatprep.subr.mxu0 0.0
    %588 = vmatpush1.msra.mxu0 0.0
    %589 = vmatprep.subr.mxu0 0.0
    %590 = vmatpush1.msra.mxu0 0.0
    %591 = vmatprep.subr.mxu0 0.0
    %592 = vmatpush1.msra.mxu0 0.0
    %593 = vmatprep.subr.mxu0 0.0
    %594 = vmatpush1.msra.mxu0 0.0
    %595 = vmatprep.subr.mxu0 0.0
    %596 = vmatpush1.msra.mxu0 0.0
    %597 = vmatprep.subr.mxu0 0.0
    %598 = vmatpush1.msra.mxu0 0.0
    %599 = vmatprep.subr.mxu0 0.0
    %600 = vmatpush1.msra.mxu0 0.0
    %601 = vmatprep.subr.mxu0 0.0
    %602 = vmatpush1.msra.mxu0 0.0
    %603 = vmatprep.subr.mxu0 0.0
    %604 = vmatpush1.msra.mxu0 0.0
    %605 = vmatprep.subr.mxu0 0.0
    %606 = vmatpush1.msra.mxu0 0.0
    %607 = vmatprep.subr.mxu0 0.0
    %608 = vmatpush1.msra.mxu0 0.0
    %609 = vmatprep.subr.mxu0 0.0
    %610 = vmatpush1.msra.mxu0 0.0
    %611 = vmatprep.subr.mxu0 0.0
    %612 = vmatpush1.msra.mxu0 0.0
    %613 = vmatprep.subr.mxu0 0.0
    %614 = vmatpush1.msra.mxu0 0.0
    %615 = vmatprep.subr.mxu0 0.0
    %616 = vmatpush1.msra.mxu0 0.0
    %617 = vmatprep.subr.mxu0 0.0
    %618 = vmatpush1.msra.mxu0 0.0
    %619 = vmatprep.subr.mxu0 0.0
    %620 = vmatpush1.msra.mxu0 0.0
    %621 = vmatprep.subr.mxu0 0.0
    %622 = vmatpush1.msra.mxu0 0.0
    %623 = vmatprep.mubr.f32.mxu0 0.0
    %624 = vmatmul.mubr.f32.gmra.mrb[0].mxu0 %v557
    %v625 = vpop.f32.mrb[0].mxu0
    %v626 = vadd.f32 0.0, %v625
    %v627 = vpop.f32.mrb[0].mxu0
    %628 = vdwg.mxu0
    %v629 = vld [vmem:[%s7] sm:$0xff]
    %v630 = vld [vmem:[%s7 + $0x8] sm:$0xff]
    %v631 = vld [vmem:[%s8] sm:$0x1]
    %v633 = vlaneseq
    %v634 = vshrl.u32 %v633, 7
    %v635 = vsub.s32 0, %v634
    %v636 = vrot.slane %v631, %v635
    %v639 = vsel %vm300, %v553, 0
    %v642 = vsel %vm300, %v626, 0
    %644 = vmatprep.subr.mxu0 0.0
    %645 = vmatpush1.msra.mxu0 %v629
    %646 = vmatprep.subr.mxu0 0.0
    %647 = vmatpush1.msra.mxu0 %v630
    %648 = vmatprep.subr.mxu0 0.0
    %649 = vmatpush1.msra.mxu0 0.0
    %650 = vmatprep.subr.mxu0 0.0
    %651 = vmatpush1.msra.mxu0 0.0
    %652 = vmatprep.subr.mxu0 0.0
    %653 = vmatpush1.msra.mxu0 0.0
    %654 = vmatprep.subr.mxu0 0.0
    %655 = vmatpush1.msra.mxu0 0.0
    %656 = vmatprep.subr.mxu0 0.0
    %657 = vmatpush1.msra.mxu0 0.0
    %658 = vmatprep.subr.mxu0 0.0
    %659 = vmatpush1.msra.mxu0 0.0
    %660 = vmatprep.subr.mxu0 0.0
    %661 = vmatpush1.msra.mxu0 0.0
    %662 = vmatprep.subr.mxu0 0.0
    %663 = vmatpush1.msra.mxu0 0.0
    %664 = vmatprep.subr.mxu0 0.0
    %665 = vmatpush1.msra.mxu0 0.0
    %666 = vmatprep.subr.mxu0 0.0
    %667 = vmatpush1.msra.mxu0 0.0
    %668 = vmatprep.subr.mxu0 0.0
    %669 = vmatpush1.msra.mxu0 0.0
    %670 = vmatprep.subr.mxu0 0.0
    %671 = vmatpush1.msra.mxu0 0.0
    %672 = vmatprep.subr.mxu0 0.0
    %673 = vmatpush1.msra.mxu0 0.0
    %674 = vmatprep.subr.mxu0 0.0
    %675 = vmatpush1.msra.mxu0 0.0
    %676 = vmatprep.subr.mxu0 0.0
    %677 = vmatpush1.msra.mxu0 0.0
    %678 = vmatprep.subr.mxu0 0.0
    %679 = vmatpush1.msra.mxu0 0.0
    %680 = vmatprep.subr.mxu0 0.0
    %681 = vmatpush1.msra.mxu0 0.0
    %682 = vmatprep.subr.mxu0 0.0
    %683 = vmatpush1.msra.mxu0 0.0
    %684 = vmatprep.subr.mxu0 0.0
    %685 = vmatpush1.msra.mxu0 0.0
    %686 = vmatprep.subr.mxu0 0.0
    %687 = vmatpush1.msra.mxu0 0.0
    %688 = vmatprep.subr.mxu0 0.0
    %689 = vmatpush1.msra.mxu0 0.0
    %690 = vmatprep.subr.mxu0 0.0
    %691 = vmatpush1.msra.mxu0 0.0
    %692 = vmatprep.subr.mxu0 0.0
    %693 = vmatpush1.msra.mxu0 0.0
    %694 = vmatprep.subr.mxu0 0.0
    %695 = vmatpush1.msra.mxu0 0.0
    %696 = vmatprep.subr.mxu0 0.0
    %697 = vmatpush1.msra.mxu0 0.0
    %698 = vmatprep.subr.mxu0 0.0
    %699 = vmatpush1.msra.mxu0 0.0
    %700 = vmatprep.subr.mxu0 0.0
    %701 = vmatpush1.msra.mxu0 0.0
    %702 = vmatprep.subr.mxu0 0.0
    %703 = vmatpush1.msra.mxu0 0.0
    %704 = vmatprep.subr.mxu0 0.0
    %705 = vmatpush1.msra.mxu0 0.0
    %706 = vmatprep.subr.mxu0 0.0
    %707 = vmatpush1.msra.mxu0 0.0
    %708 = vmatprep.mubr.f32.mxu0 0.0
    %709 = vmatmul.mubr.f32.gmra.mrb[0].mxu0 %v639
    %v710 = vpop.f32.mrb[0].mxu0
    %v711 = vadd.f32 %v636, %v710
    %v712 = vpop.f32.mrb[0].mxu0
    %713 = vmatprep.mubr.f32.mxu0 0.0
    %714 = vmatmul.mubr.f32.gmra.mrb[0].mxu0 %v642
    %v715 = vpop.f32.mrb[0].mxu0
    %v716 = vadd.f32 %v636, %v715
    %v717 = vpop.f32.mrb[0].mxu0
    %718 = vdwg.mxu0
    %719 = vst.msk [vmem:[#allocation2] sm:$0xff] %vm46, %v711
    %720 = vst.msk [vmem:[#allocation2 + $0x8] sm:$0xff] %vm46, %v716
    // Predicated region
    $region38: #{tpu_custom_call.1} parent=1 // pred_check
      _
    $region39: #{tpu_custom_call.1} parent=1 // pred_check_branch
      %722 = sbr.rel (0) target = $region41
    $region40: #{tpu_custom_call.1} parent=1 // pred_region
      %s724 = ssub.s32 256, 256
      %725 = vsyncadd [#allocation3], %s724
      %s726 = sshll.u32 [#allocation2], 4
      %s727 = int_to_ptr.vmem [resolvable:$true] %s726
      %732 = dma.vmem_to_hbm [thread:$0]  %s727, 256, %s9, [#allocation3], 128, 128, 8
    $region41: #{tpu_custom_call.1} parent=1 // pred_fallthru
      _
    // Predicated region
    $region42: #{tpu_custom_call.1} parent=1 // pred_check
      _
    $region43: #{tpu_custom_call.1} parent=1 // pred_check_branch
      %734 = sbr.rel (0) target = $region45
    $region44: #{tpu_custom_call.1} parent=1 // pred_region
      %735 = dma.done [#allocation3], 256
    $region45: #{tpu_custom_call.1} parent=1 // pred_fallthru
      _
    %736 = vsyncpa [#allocation3], 1

</llo_original>
